<compile_context>
chip_gen: v6e
topology: v6e:2x2x1
jax: 0.10.0
libtpu: 0.0.40
codegen_flags: <defaults>
</compile_context>

<pallas_src>
import jax
import jax.numpy as jnp
from jax import lax
from jax.experimental import pallas as pl
from jax.experimental.pallas import tpu as pltpu


def _connected_kernel(x_ref, w1_ref, b1_ref, w2_ref, b2_ref, out_ref):
    x = x_ref[...]                                   # (TILE_B, in)

    # Layer 1 on the MXU, batch on the lane axis of the result:
    #   hT[j, b] = sum_k W1[j, k] * x[b, k]          -> (hidden, TILE_B)
    hT = lax.dot_general(
        w1_ref[...], x,
        dimension_numbers=(((1,), (1,)), ((), ())),   # A @ B^T pattern
        preferred_element_type=jnp.float32,
    )
    hT = jnp.maximum(hT + b1_ref[...], 0.0)           # bias bcast over lanes + ReLU

    # Layer 2 (output width 1): VPU multiply by the (hidden,1) column weight,
    # then a sublane (XLU) reduce -> lane-dense (1, TILE_B) row.
    logit = jnp.sum(hT * w2_ref[...], axis=0, keepdims=True)    # (1, TILE_B)

    out_ref[...] = jax.nn.sigmoid(logit + b2_ref[0, 0]).astype(out_ref.dtype)


def connected_forward(x, params, *, tile_b=128):
    """sigmoid(relu(x @ W1.T + b1) @ w2 + b2), returned as (B, 1)."""
    w1, b1, w2, b2 = params
    B, in_dim = x.shape
    hidden = w1.shape[0]

    num_tiles = pl.cdiv(B, tile_b)
    B_pad = num_tiles * tile_b
    if B_pad != B:
        x = jnp.pad(x, ((0, B_pad - B), (0, 0)))

    out_row = pl.pallas_call(
        _connected_kernel,
        out_shape=jax.ShapeDtypeStruct((1, B_pad), jnp.float32),
        grid=(num_tiles,),
        in_specs=[
            pl.BlockSpec((tile_b, in_dim), lambda i: (i, 0)),        # x tile
            pl.BlockSpec((hidden, in_dim), lambda i: (0, 0)),        # W1 (resident)
            pl.BlockSpec((hidden, 1), lambda i: (0, 0)),             # b1 (resident)
            pl.BlockSpec((hidden, 1), lambda i: (0, 0)),             # w2 (resident)
            pl.BlockSpec(memory_space=pltpu.MemorySpace.SMEM),       # b2 scalar
        ],
        out_specs=pl.BlockSpec((1, tile_b), lambda i: (0, i)),       # lane-dense row
        compiler_params=pltpu.CompilerParams(
            dimension_semantics=("parallel",),
        ),
    )(x, w1, b1, w2, b2)

    return out_row[0, :B].reshape(B, 1)


def init_params(key, in_dim, hidden):
    """PyTorch nn.Linear-style init: U(-1/sqrt(fan_in), 1/sqrt(fan_in)).
    W1 stored torch-style (hidden, in); second-layer weight as a (hidden, 1) column."""
    k1w, k1b, k2w, k2b = jax.random.split(key, 4)

    b1_bound = 1.0 / (in_dim ** 0.5)
    w1 = jax.random.uniform(k1w, (hidden, in_dim), jnp.float32, -b1_bound, b1_bound)
    b1 = jax.random.uniform(k1b, (hidden, 1), jnp.float32, -b1_bound, b1_bound)

    b2_bound = 1.0 / (hidden ** 0.5)
    w2 = jax.random.uniform(k2w, (hidden, 1), jnp.float32, -b2_bound, b2_bound)
    b2 = jax.random.uniform(k2b, (1, 1), jnp.float32, -b2_bound, b2_bound)
    return (w1, b1, w2, b2)


if __name__ == "__main__":
    # Lane/sublane-aligned shapes; B chosen so the batch grid has >1 step.
    config = {"in": 32, "hidden": 128}
    B = 256
    TILE_B = 128

    key = jax.random.PRNGKey(0)
    k_x, k_p = jax.random.split(key)

    x = jax.random.normal(k_x, (B, config["in"]), jnp.float32)
    params = init_params(k_p, config["in"], config["hidden"])

    out = connected_forward(x, params, tile_b=TILE_B)
    jax.block_until_ready(out)

    # Pure-JAX reference (same forward as the PyTorch module).
    w1, b1, w2, b2 = params
    h = jnp.maximum(x @ w1.T + b1[:, 0], 0.0)        # (B, hidden)
    ref = jax.nn.sigmoid(h @ w2 + b2[0, 0])          # (B, 1)

    assert out.shape == (B, 1)
    assert jnp.allclose(out, ref, atol=1e-4, rtol=1e-4)

    print("KERNEL_OK")
</pallas_src>

<mosaic_0001>
module attributes {stable_mosaic.version = 11 : i64} {
  func.func @_connected_kernel(%arg0: i32, %arg1: memref<128x32xf32, #tpu.memory_space<vmem>>, %arg2: memref<128x32xf32, #tpu.memory_space<vmem>>, %arg3: memref<128x1xf32, #tpu.memory_space<vmem>>, %arg4: memref<128x1xf32, #tpu.memory_space<vmem>>, %arg5: memref<1x1xf32, #tpu.memory_space<smem>>, %arg6: memref<1x128xf32, #tpu.memory_space<vmem>>) attributes {dimension_semantics = [#tpu.dimension_semantics<parallel>], iteration_bounds = array<i64: 2>, scalar_prefetch = 0 : i64, scratch_operands = 0 : i64, tpu.core_type = #tpu.core_type<tc>, window_params = [{transform_indices = @transform_0, window_bounds = array<i64: 128, 32>}, {pipeline_mode = #tpu.pipeline_mode<synchronous>, transform_indices = @transform_1, window_bounds = array<i64: 128, 32>}, {pipeline_mode = #tpu.pipeline_mode<synchronous>, transform_indices = @transform_2, window_bounds = array<i64: 128, 1>}, {pipeline_mode = #tpu.pipeline_mode<synchronous>, transform_indices = @transform_3, window_bounds = array<i64: 128, 1>}, {transform_indices = @transform_4, window_bounds = array<i64: 1, 1>}, {transform_indices = @transform_5, window_bounds = array<i64: 1, 128>}]} {
    %c0 = arith.constant 0 : index
    %c0_0 = arith.constant 0 : index
    %0 = vector.load %arg1[%c0, %c0_0] : memref<128x32xf32, #tpu.memory_space<vmem>>, vector<128x32xf32>
    %c0_1 = arith.constant 0 : index
    %c0_2 = arith.constant 0 : index
    %1 = vector.load %arg2[%c0_1, %c0_2] : memref<128x32xf32, #tpu.memory_space<vmem>>, vector<128x32xf32>
    %cst = arith.constant dense<0.000000e+00> : vector<128x128xf32>
    %2 = tpu.matmul %1, %0, %cst {dimension_numbers = #tpu.dot_dimension_numbers<[1], [1], [0], [0], [0, 0, 1, 0], [], []>} : vector<128x32xf32>, vector<128x32xf32>, vector<128x128xf32> -> vector<128x128xf32>
    %c0_3 = arith.constant 0 : index
    %c0_4 = arith.constant 0 : index
    %3 = vector.load %arg3[%c0_3, %c0_4] : memref<128x1xf32, #tpu.memory_space<vmem>>, vector<128x1xf32>
    %4 = vector.broadcast %3 : vector<128x1xf32> to vector<128x128xf32>
    %5 = arith.addf %2, %4 : vector<128x128xf32>
    %cst_5 = arith.constant 0.000000e+00 : f32
    %6 = vector.broadcast %cst_5 : f32 to vector<128x128xf32>
    %7 = arith.maximumf %5, %6 : vector<128x128xf32>
    %c0_6 = arith.constant 0 : index
    %c0_7 = arith.constant 0 : index
    %8 = vector.load %arg4[%c0_6, %c0_7] : memref<128x1xf32, #tpu.memory_space<vmem>>, vector<128x1xf32>
    %9 = vector.broadcast %8 : vector<128x1xf32> to vector<128x128xf32>
    %10 = arith.mulf %7, %9 : vector<128x128xf32>
    %cst_8 = arith.constant dense<0.000000e+00> : vector<128xf32>
    %11 = vector.multi_reduction <add>, %10, %cst_8 [0] : vector<128x128xf32> to vector<128xf32>
    %12 = vector.shape_cast %11 : vector<128xf32> to vector<1x128xf32>
    %c0_9 = arith.constant 0 : index
    %c0_10 = arith.constant 0 : index
    %13 = memref.load %arg5[%c0_9, %c0_10] : memref<1x1xf32, #tpu.memory_space<smem>>
    %14 = vector.broadcast %13 : f32 to vector<1x128xf32>
    %15 = arith.addf %12, %14 : vector<1x128xf32>
    %16 = arith.negf %15 : vector<1x128xf32>
    %17 = math.exp %16 : vector<1x128xf32>
    %cst_11 = arith.constant 1.000000e+00 : f32
    %18 = vector.broadcast %cst_11 : f32 to vector<1x128xf32>
    %19 = arith.addf %18, %17 : vector<1x128xf32>
    %20 = arith.divf %18, %19 : vector<1x128xf32>
    %c0_12 = arith.constant 0 : index
    %c0_13 = arith.constant 0 : index
    %21 = vector.load %arg6[%c0_12, %c0_13] : memref<1x128xf32, #tpu.memory_space<vmem>>, vector<1x128xf32>
    tpu.vector_store %arg6[%c0_12, %c0_13], %20 {strides = array<i32>} : memref<1x128xf32, #tpu.memory_space<vmem>>, vector<1x128xf32>,
    return
  }
  func.func @transform_0(%arg0: i32) -> (i32, i32) {
    %c0_i32 = arith.constant 0 : i32
    %c0_i32_0 = arith.constant 0 : i32
    return %arg0, %c0_i32 : i32, i32
  }
  func.func @transform_1(%arg0: i32) -> (i32, i32) {
    %c0_i32 = arith.constant 0 : i32
    %c0_i32_0 = arith.constant 0 : i32
    %c0_i32_1 = arith.constant 0 : i32
    return %c0_i32, %c0_i32_0 : i32, i32
  }
  func.func @transform_2(%arg0: i32) -> (i32, i32) {
    %c0_i32 = arith.constant 0 : i32
    %c0_i32_0 = arith.constant 0 : i32
    %c0_i32_1 = arith.constant 0 : i32
    return %c0_i32, %c0_i32_0 : i32, i32
  }
  func.func @transform_3(%arg0: i32) -> (i32, i32) {
    %c0_i32 = arith.constant 0 : i32
    %c0_i32_0 = arith.constant 0 : i32
    %c0_i32_1 = arith.constant 0 : i32
    return %c0_i32, %c0_i32_0 : i32, i32
  }
  func.func @transform_4(%arg0: i32) -> (i32, i32) {
    %c0_i32 = arith.constant 0 : i32
    %c0_i32_0 = arith.constant 0 : i32
    %c0_i32_1 = arith.constant 0 : i32
    return %c0_i32, %c0_i32_0 : i32, i32
  }
  func.func @transform_5(%arg0: i32) -> (i32, i32) {
    %c0_i32 = arith.constant 0 : i32
    %c0_i32_0 = arith.constant 0 : i32
    return %c0_i32, %arg0 : i32, i32
  }
}

</mosaic_0001>

<llo_original>
// kernel: tpu_custom_call.1
$region0: #{tpu_custom_call.1}
  #allocation0 [shape = 'u32[]', space=smem, size = 0x4, offset = 0x4, fixed_abs, tag = 'smem constant byte address 0x4 - core index']
  #allocation1 [shape = 'u32[144,128]{1,0:T(1,128)}', space=vmem, size = 0x12000, scoped, tag = 'internal scratch']
  #allocation2 [shape = 'f32[1,1]{1,0:T(1,128)S(6)}', space=smem, size = 0x200, scoped, tag = 'scoped memory for tpu_custom_call.1']
  %s0 = inlined_call_operand.vmem [shape: f32[256,32], index: 0, kind: input, shape index: {}]
  %s1 = inlined_call_operand.vmem [shape: f32[128,32], index: 1, kind: input, shape index: {}]
  %s2 = inlined_call_operand.vmem [shape: f32[128,1], index: 2, kind: input, shape index: {}]
  %s3 = inlined_call_operand.vmem [shape: f32[128,1], index: 3, kind: input, shape index: {}]
  %s4 = inlined_call_operand.<no memory space> [shape: f32[1,1], index: 4, kind: input, shape index: {}]
  %s5 = inlined_call_operand.hbm [shape: f32[1,256], index: 5, kind: output, shape index: {}]
  %s6 = sld [smem:[#allocation0]]
  $region53: #{tpu_custom_call.1} parent=0
    _
  %s8 = ssub.s32 1, %s6
  %s9 = scalar_select 0, %s8, %s6
  %10 = sst [smem:[#allocation2]] %s4
  $region1: #{tpu_custom_call.1} parent=0
    #allocation3 [shape = 'u8[1024]{0}', space=vmem, size = 0x400, scoped, tag = 'output window, operand 0']
    #allocation4 [shape = 's32[2]{0}', space=sflag, size = 0x8, scoped, tag = 'scoped memory for tpu_custom_call.1']
    %11 = vsyncpa [#allocation4], 0
    %s12 = scalar_lea.sflag [#allocation4], 1
    %13 = vsyncpa %s12, 0
    loop: start=0, step=1, limit=4
    $region2: #{tpu_custom_call.1} parent=1 // loop_pre_header
      _
    $region3: #{tpu_custom_call.1} parent=1 // loop_header
      %s15 = sphi 0, %s19
      %p16 = scmp.ge.s32.totalorder %s15, 4
      %s25 = sphi 0, %s27
      %s28 = sphi 0, %s25
      %s29 = sphi 0, %s28
      %s45 = sphi 0, %s29
      %s49 = sphi 0, %s49
      %s51 = sphi 0, %s49
      %s52 = sphi 0, %s51
      %s66 = sphi 0, %s52
      %s70 = sphi 0, %s70
      %s72 = sphi 0, %s70
      %s73 = sphi 0, %s72
      %s87 = sphi 0, %s73
      %s91 = sphi 0, %s91
      %s93 = sphi 0, %s91
      %s94 = sphi 0, %s93
      %s108 = sphi 0, %s94
      %s112 = sphi 0, %s112
      %s114 = sphi 0, %s112
      %s115 = sphi 0, %s114
      %s129 = sphi 0, %s115
      %s135 = sphi 0, %s137
      %s138 = sphi 0, %s135
      %s139 = sphi 0, %s138
      %s155 = sphi 0, %s139
    $region4: #{tpu_custom_call.1} parent=1 // loop_header_branch
      %18 = sbr.rel (%p16) target = $region8
    $region5: #{tpu_custom_call.1} parent=1 // loop_body
      %s20 = ssub.s32 %s15, 1
      %s21 = ssub.s32 %s15, 2
      %s22 = sadd.s32 %s15, 1
      %s23 = ssub.s32 %s15, %s22
      %p24 = scmp.eq.s32.totalorder %s23, 0
      %s26 = sadd.s32 %s25, 1
      %s27 = scalar_select %p24, %s25, %s26
      %p30 = pneg %p24
      %p31 = scmp.eq.s32.totalorder %s15, 1
      %p32 = por %p30, %p31
      %p33 = scmp.ne.s32.totalorder %s25, %s28
      %p34 = scmp.eq.s32.totalorder %s15, 0
      %p35 = por %p33, %p34
      %p36 = scmp.ne.s32.totalorder %s25, %s28
      %p37 = scmp.eq.s32.totalorder %s20, 1
      %p38 = por %p36, %p37
      %p39 = scmp.ne.s32.totalorder %s28, %s29
      %p40 = scmp.eq.s32.totalorder %s20, 0
      %p41 = por %p39, %p40
      %p42 = scmp.ne.s32.totalorder %s28, %s29
      %p43 = scmp.eq.s32.totalorder %s21, 1
      %p44 = por %p42, %p43
      %p46 = scmp.ne.s32.totalorder %s29, %s45
      %p47 = scmp.eq.s32.totalorder %s21, 0
      %p48 = por %p46, %p47
      %s50 = sadd.s32 %s49, 1
      %p53 = scmp.eq.s32.totalorder %s15, 1
      %p54 = scmp.ne.s32.totalorder %s49, %s51
      %p55 = scmp.eq.s32.totalorder %s15, 0
      %p56 = por %p54, %p55
      %p57 = scmp.ne.s32.totalorder %s49, %s51
      %p58 = scmp.eq.s32.totalorder %s20, 1
      %p59 = por %p57, %p58
      %p60 = scmp.ne.s32.totalorder %s51, %s52
      %p61 = scmp.eq.s32.totalorder %s20, 0
      %p62 = por %p60, %p61
      %p63 = scmp.ne.s32.totalorder %s51, %s52
      %p64 = scmp.eq.s32.totalorder %s21, 1
      %p65 = por %p63, %p64
      %p67 = scmp.ne.s32.totalorder %s52, %s66
      %p68 = scmp.eq.s32.totalorder %s21, 0
      %p69 = por %p67, %p68
      %s71 = sadd.s32 %s70, 1
      %p74 = scmp.eq.s32.totalorder %s15, 1
      %p75 = scmp.ne.s32.totalorder %s70, %s72
      %p76 = scmp.eq.s32.totalorder %s15, 0
      %p77 = por %p75, %p76
      %p78 = scmp.ne.s32.totalorder %s70, %s72
      %p79 = scmp.eq.s32.totalorder %s20, 1
      %p80 = por %p78, %p79
      %p81 = scmp.ne.s32.totalorder %s72, %s73
      %p82 = scmp.eq.s32.totalorder %s20, 0
      %p83 = por %p81, %p82
      %p84 = scmp.ne.s32.totalorder %s72, %s73
      %p85 = scmp.eq.s32.totalorder %s21, 1
      %p86 = por %p84, %p85
      %p88 = scmp.ne.s32.totalorder %s73, %s87
      %p89 = scmp.eq.s32.totalorder %s21, 0
      %p90 = por %p88, %p89
      %s92 = sadd.s32 %s91, 1
      %p95 = scmp.eq.s32.totalorder %s15, 1
      %p96 = scmp.ne.s32.totalorder %s91, %s93
      %p97 = scmp.eq.s32.totalorder %s15, 0
      %p98 = por %p96, %p97
      %p99 = scmp.ne.s32.totalorder %s91, %s93
      %p100 = scmp.eq.s32.totalorder %s20, 1
      %p101 = por %p99, %p100
      %p102 = scmp.ne.s32.totalorder %s93, %s94
      %p103 = scmp.eq.s32.totalorder %s20, 0
      %p104 = por %p102, %p103
      %p105 = scmp.ne.s32.totalorder %s93, %s94
      %p106 = scmp.eq.s32.totalorder %s21, 1
      %p107 = por %p105, %p106
      %p109 = scmp.ne.s32.totalorder %s94, %s108
      %p110 = scmp.eq.s32.totalorder %s21, 0
      %p111 = por %p109, %p110
      %s113 = sadd.s32 %s112, 1
      %p116 = scmp.eq.s32.totalorder %s15, 1
      %p117 = scmp.ne.s32.totalorder %s112, %s114
      %p118 = scmp.eq.s32.totalorder %s15, 0
      %p119 = por %p117, %p118
      %p120 = scmp.ne.s32.totalorder %s112, %s114
      %p121 = scmp.eq.s32.totalorder %s20, 1
      %p122 = por %p120, %p121
      %p123 = scmp.ne.s32.totalorder %s114, %s115
      %p124 = scmp.eq.s32.totalorder %s20, 0
      %p125 = por %p123, %p124
      %p126 = scmp.ne.s32.totalorder %s114, %s115
      %p127 = scmp.eq.s32.totalorder %s21, 1
      %p128 = por %p126, %p127
      %p130 = scmp.ne.s32.totalorder %s115, %s129
      %p131 = scmp.eq.s32.totalorder %s21, 0
      %p132 = por %p130, %p131
      %s133 = ssub.s32 %s15, %s22
      %p134 = scmp.eq.s32.totalorder %s133, 0
      %s136 = sadd.s32 %s135, 1
      %s137 = scalar_select %p134, %s135, %s136
      %p140 = pneg %p134
      %p141 = scmp.eq.s32.totalorder %s15, 1
      %p142 = por %p140, %p141
      %p143 = scmp.ne.s32.totalorder %s135, %s138
      %p144 = scmp.eq.s32.totalorder %s15, 0
      %p145 = por %p143, %p144
      %p146 = scmp.ne.s32.totalorder %s135, %s138
      %p147 = scmp.eq.s32.totalorder %s20, 1
      %p148 = por %p146, %p147
      %p149 = scmp.ne.s32.totalorder %s138, %s139
      %p150 = scmp.eq.s32.totalorder %s20, 0
      %p151 = por %p149, %p150
      %p152 = scmp.ne.s32.totalorder %s138, %s139
      %p153 = scmp.eq.s32.totalorder %s21, 1
      %p154 = por %p152, %p153
      %p156 = scmp.ne.s32.totalorder %s139, %s155
      %p157 = scmp.eq.s32.totalorder %s21, 0
      %p158 = por %p156, %p157
      %p159 = scmp.le.s32.totalorder 1, %s15
      %p160 = scmp.lt.s32.totalorder %s15, 3
      %p161 = pnand %p159, %p160
      %p162 = pneg %p161
      // Predicated region
      $region9: #{tpu_custom_call.1} parent=5 // pred_check
        _
      $region10: #{tpu_custom_call.1} parent=5 // pred_check_branch
        %164 = sbr.rel (%p161) target = $region12
      $region11: #{tpu_custom_call.1} parent=5 // pred_region
        %s165 = ssub.s32 %s15, 1
        // Predicated region
        $region13: #{tpu_custom_call.1} parent=11 // pred_check
          %p166 = pneg %p62
        $region14: #{tpu_custom_call.1} parent=11 // pred_check_branch
          %168 = sbr.rel (%p166) target = $region16
        $region15: #{tpu_custom_call.1} parent=11 // pred_region
          _
        $region16: #{tpu_custom_call.1} parent=11 // pred_fallthru
          _
        // Predicated region
        $region17: #{tpu_custom_call.1} parent=11 // pred_check
          %p169 = pneg %p83
        $region18: #{tpu_custom_call.1} parent=11 // pred_check_branch
          %171 = sbr.rel (%p169) target = $region20
        $region19: #{tpu_custom_call.1} parent=11 // pred_region
          _
        $region20: #{tpu_custom_call.1} parent=11 // pred_fallthru
          _
        // Predicated region
        $region21: #{tpu_custom_call.1} parent=11 // pred_check
          %p172 = pneg %p104
        $region22: #{tpu_custom_call.1} parent=11 // pred_check_branch
          %174 = sbr.rel (%p172) target = $region24
        $region23: #{tpu_custom_call.1} parent=11 // pred_region
          _
        $region24: #{tpu_custom_call.1} parent=11 // pred_fallthru
          _
        // Predicated region
        $region25: #{tpu_custom_call.1} parent=11 // pred_check
          %p175 = pneg %p125
        $region26: #{tpu_custom_call.1} parent=11 // pred_check_branch
          %177 = sbr.rel (%p175) target = $region28
        $region27: #{tpu_custom_call.1} parent=11 // pred_region
          _
        $region28: #{tpu_custom_call.1} parent=11 // pred_fallthru
          _
      $region12: #{tpu_custom_call.1} parent=5 // pred_fallthru
        _
      %p178 = scmp.lt.s32.totalorder %s15, 2
      // Predicated region
      $region29: #{tpu_custom_call.1} parent=5 // pred_check
        %p179 = pneg %p178
      $region30: #{tpu_custom_call.1} parent=5 // pred_check_branch
        %181 = sbr.rel (%p179) target = $region32
      $region31: #{tpu_custom_call.1} parent=5 // pred_region
        // Predicated region
        $region33: #{tpu_custom_call.1} parent=31 // pred_check
          %p182 = pneg %p35
        $region34: #{tpu_custom_call.1} parent=31 // pred_check_branch
          %184 = sbr.rel (%p182) target = $region36
        $region35: #{tpu_custom_call.1} parent=31 // pred_region
          %s185 = smul.u32 16, %s15
          %p186 = scmp.lt.s32.totalorder %s185, 31
          %s187 = scalar_select %p186, %s185, 31
          %s188 = smul.addr %s187, 8
          %s189 = scalar_lea.vmem %s0, %s188
          %s190 = smul.u32 16, %s15
        $region36: #{tpu_custom_call.1} parent=31 // pred_fallthru
          _
      $region32: #{tpu_custom_call.1} parent=5 // pred_fallthru
        _
      %p191 = scmp.le.s32.totalorder 1, %s15
      %p192 = scmp.lt.s32.totalorder %s15, 3
      %p193 = pnand %p191, %p192
      %p194 = pneg %p193
      // Predicated region
      $region37: #{tpu_custom_call.1} parent=5 // pred_check
        _
      $region38: #{tpu_custom_call.1} parent=5 // pred_check_branch
        %196 = sbr.rel (%p193) target = $region40
      $region39: #{tpu_custom_call.1} parent=5 // pred_region
        %s197 = ssub.s32 %s15, 1
        %s198 = smul.u32 16, %s20
        %p199 = scmp.lt.s32.totalorder %s198, 31
        %s200 = scalar_select %p199, %s198, 31
        %s201 = smul.addr %s200, 8
        %s202 = scalar_lea.vmem %s0, %s201
        %p203 = pneg %p41
        %p204 = pneg %p38
        %p205 = pneg %p62
        %p206 = pneg %p59
        %p207 = pneg %p83
        %p208 = pneg %p80
        %p209 = pneg %p104
        %p210 = pneg %p101
        %p211 = pneg %p125
        %p212 = pneg %p122
        %p213 = pneg %p151
        %p214 = pneg %p148
        %s215 = sand.u32 %s138, 1
        %s216 = scalar_lea.sflag [#allocation4], %s215
        %s217 = sand.u32 %s138, 1
        %s218 = scalar_lea.vmem [#allocation3], %s217
        %s219 = smul.u32 16, %s20
        %p220 = scmp.lt.s32.totalorder %s219, 31
        %s221 = scalar_select %p220, %s219, 31
        %s222 = smul.addr %s221, 8
        %s223 = scalar_lea.vmem %s0, %s222
        %s224 = smul.u32 16, %s20
        %v225 = vld [vmem:[%s223] sm:$0xff]
        %v226 = vld [vmem:[%s223 + $0x8] sm:$0xff]
        %v227 = vld [vmem:[%s223 + $0x10] sm:$0xff]
        %v228 = vld [vmem:[%s223 + $0x18] sm:$0xff]
        %v229 = vld [vmem:[%s223 + $0x20] sm:$0xff]
        %v230 = vld [vmem:[%s223 + $0x28] sm:$0xff]
        %v231 = vld [vmem:[%s223 + $0x30] sm:$0xff]
        %v232 = vld [vmem:[%s223 + $0x38] sm:$0xff]
        %v233 = vld [vmem:[%s223 + $0x40] sm:$0xff]
        %v234 = vld [vmem:[%s223 + $0x48] sm:$0xff]
        %v235 = vld [vmem:[%s223 + $0x50] sm:$0xff]
        %v236 = vld [vmem:[%s223 + $0x58] sm:$0xff]
        %v237 = vld [vmem:[%s223 + $0x60] sm:$0xff]
        %v238 = vld [vmem:[%s223 + $0x68] sm:$0xff]
        %v239 = vld [vmem:[%s223 + $0x70] sm:$0xff]
        %v240 = vld [vmem:[%s223 + $0x78] sm:$0xff]
        %v241 = vld [vmem:[%s1] sm:$0xff]
        %v242 = vld [vmem:[%s1 + $0x8] sm:$0xff]
        %v243 = vld [vmem:[%s1 + $0x10] sm:$0xff]
        %v244 = vld [vmem:[%s1 + $0x18] sm:$0xff]
        %v245 = vld [vmem:[%s1 + $0x20] sm:$0xff]
        %v246 = vld [vmem:[%s1 + $0x28] sm:$0xff]
        %v247 = vld [vmem:[%s1 + $0x30] sm:$0xff]
        %v248 = vld [vmem:[%s1 + $0x38] sm:$0xff]
        %v249 = vld [vmem:[%s1 + $0x40] sm:$0xff]
        %v250 = vld [vmem:[%s1 + $0x48] sm:$0xff]
        %v251 = vld [vmem:[%s1 + $0x50] sm:$0xff]
        %v252 = vld [vmem:[%s1 + $0x58] sm:$0xff]
        %v253 = vld [vmem:[%s1 + $0x60] sm:$0xff]
        %v254 = vld [vmem:[%s1 + $0x68] sm:$0xff]
        %v255 = vld [vmem:[%s1 + $0x70] sm:$0xff]
        %v256 = vld [vmem:[%s1 + $0x78] sm:$0xff]
        %v257 = vld [vmem:[%s2] sm:$0xff]
        %v258 = vld [vmem:[%s2 + $0x8] sm:$0xff]
        %v259 = vld [vmem:[%s2 + $0x10] sm:$0xff]
        %v260 = vld [vmem:[%s2 + $0x18] sm:$0xff]
        %v261 = vld [vmem:[%s2 + $0x20] sm:$0xff]
        %v262 = vld [vmem:[%s2 + $0x28] sm:$0xff]
        %v263 = vld [vmem:[%s2 + $0x30] sm:$0xff]
        %v264 = vld [vmem:[%s2 + $0x38] sm:$0xff]
        %v265 = vld [vmem:[%s2 + $0x40] sm:$0xff]
        %v266 = vld [vmem:[%s2 + $0x48] sm:$0xff]
        %v267 = vld [vmem:[%s2 + $0x50] sm:$0xff]
        %v268 = vld [vmem:[%s2 + $0x58] sm:$0xff]
        %v269 = vld [vmem:[%s2 + $0x60] sm:$0xff]
        %v270 = vld [vmem:[%s2 + $0x68] sm:$0xff]
        %v271 = vld [vmem:[%s2 + $0x70] sm:$0xff]
        %v272 = vld [vmem:[%s2 + $0x78] sm:$0xff]
        %274 = vset.pattern.permute.xlu0 0
        %275 = vperm.xlu0 %274, %v257
        %v276 = vpop.permute.xlu0 %275
        %279 = vset.pattern.permute.xlu0 0
        %280 = vperm.xlu0 %279, %v258
        %v281 = vpop.permute.xlu0 %280
        %284 = vset.pattern.permute.xlu0 0
        %285 = vperm.xlu0 %284, %v259
        %v286 = vpop.permute.xlu0 %285
        %289 = vset.pattern.permute.xlu0 0
        %290 = vperm.xlu0 %289, %v260
        %v291 = vpop.permute.xlu0 %290
        %294 = vset.pattern.permute.xlu0 0
        %295 = vperm.xlu0 %294, %v261
        %v296 = vpop.permute.xlu0 %295
        %299 = vset.pattern.permute.xlu0 0
        %300 = vperm.xlu0 %299, %v262
        %v301 = vpop.permute.xlu0 %300
        %304 = vset.pattern.permute.xlu0 0
        %305 = vperm.xlu0 %304, %v263
        %v306 = vpop.permute.xlu0 %305
        %309 = vset.pattern.permute.xlu0 0
        %310 = vperm.xlu0 %309, %v264
        %v311 = vpop.permute.xlu0 %310
        %314 = vset.pattern.permute.xlu0 0
        %315 = vperm.xlu0 %314, %v265
        %v316 = vpop.permute.xlu0 %315
        %319 = vset.pattern.permute.xlu0 0
        %320 = vperm.xlu0 %319, %v266
        %v321 = vpop.permute.xlu0 %320
        %324 = vset.pattern.permute.xlu0 0
        %325 = vperm.xlu0 %324, %v267
        %v326 = vpop.permute.xlu0 %325
        %329 = vset.pattern.permute.xlu0 0
        %330 = vperm.xlu0 %329, %v268
        %v331 = vpop.permute.xlu0 %330
        %334 = vset.pattern.permute.xlu0 0
        %335 = vperm.xlu0 %334, %v269
        %v336 = vpop.permute.xlu0 %335
        %339 = vset.pattern.permute.xlu0 0
        %340 = vperm.xlu0 %339, %v270
        %v341 = vpop.permute.xlu0 %340
        %344 = vset.pattern.permute.xlu0 0
        %345 = vperm.xlu0 %344, %v271
        %v346 = vpop.permute.xlu0 %345
        %349 = vset.pattern.permute.xlu0 0
        %350 = vperm.xlu0 %349, %v272
        %v351 = vpop.permute.xlu0 %350
        %vm353 = vcmask 261120
        %v355 = vsel %vm353, %v241, 0
        %v358 = vsel %vm353, %v242, 0
        %v361 = vsel %vm353, %v243, 0
        %v364 = vsel %vm353, %v244, 0
        %v367 = vsel %vm353, %v245, 0
        %v370 = vsel %vm353, %v246, 0
        %v373 = vsel %vm353, %v247, 0
        %v376 = vsel %vm353, %v248, 0
        %v379 = vsel %vm353, %v249, 0
        %v382 = vsel %vm353, %v250, 0
        %v385 = vsel %vm353, %v251, 0
        %v388 = vsel %vm353, %v252, 0
        %v391 = vsel %vm353, %v253, 0
        %v394 = vsel %vm353, %v254, 0
        %v397 = vsel %vm353, %v255, 0
        %v400 = vsel %vm353, %v256, 0
        %v403 = vsel %vm353, %v225, 0
        %v406 = vsel %vm353, %v226, 0
        %v409 = vsel %vm353, %v227, 0
        %v412 = vsel %vm353, %v228, 0
        %v415 = vsel %vm353, %v229, 0
        %v418 = vsel %vm353, %v230, 0
        %v421 = vsel %vm353, %v231, 0
        %v424 = vsel %vm353, %v232, 0
        %v427 = vsel %vm353, %v233, 0
        %v430 = vsel %vm353, %v234, 0
        %v433 = vsel %vm353, %v235, 0
        %v436 = vsel %vm353, %v236, 0
        %v439 = vsel %vm353, %v237, 0
        %v442 = vsel %vm353, %v238, 0
        %v445 = vsel %vm353, %v239, 0
        %v448 = vsel %vm353, %v240, 0
        %450 = vmatprep.subr.mxu0 0.0
        %451 = vmatpush1.xpose.msra.mxu0 %v448
        %452 = vmatprep.subr.mxu0 0.0
        %453 = vmatpush1.xpose.msra.mxu0 %v445
        %454 = vmatprep.subr.mxu0 0.0
        %455 = vmatpush1.xpose.msra.mxu0 %v442
        %456 = vmatprep.subr.mxu0 0.0
        %457 = vmatpush1.xpose.msra.mxu0 %v439
        %458 = vmatprep.subr.mxu0 0.0
        %459 = vmatpush1.xpose.msra.mxu0 %v436
        %460 = vmatprep.subr.mxu0 0.0
        %461 = vmatpush1.xpose.msra.mxu0 %v433
        %462 = vmatprep.subr.mxu0 0.0
        %463 = vmatpush1.xpose.msra.mxu0 %v430
        %464 = vmatprep.subr.mxu0 0.0
        %465 = vmatpush1.xpose.msra.mxu0 %v427
        %466 = vmatprep.subr.mxu0 0.0
        %467 = vmatpush1.xpose.msra.mxu0 %v424
        %468 = vmatprep.subr.mxu0 0.0
        %469 = vmatpush1.xpose.msra.mxu0 %v421
        %470 = vmatprep.subr.mxu0 0.0
        %471 = vmatpush1.xpose.msra.mxu0 %v418
        %472 = vmatprep.subr.mxu0 0.0
        %473 = vmatpush1.xpose.msra.mxu0 %v415
        %474 = vmatprep.subr.mxu0 0.0
        %475 = vmatpush1.xpose.msra.mxu0 %v412
        %476 = vmatprep.subr.mxu0 0.0
        %477 = vmatpush1.xpose.msra.mxu0 %v409
        %478 = vmatprep.subr.mxu0 0.0
        %479 = vmatpush1.xpose.msra.mxu0 %v406
        %480 = vmatprep.subr.mxu0 0.0
        %481 = vmatpush1.xpose.msra.mxu0 %v403
        %482 = vmatprep.subr.mxu0 0.0
        %483 = vmatpush2.xpose.msra.mxu0 0.0
        %484 = vmatprep.subr.mxu0 0.0
        %485 = vmatpush2.xpose.msra.mxu0 0.0
        %486 = vmatprep.subr.mxu0 0.0
        %487 = vmatpush2.xpose.msra.mxu0 0.0
        %488 = vmatprep.subr.mxu0 0.0
        %489 = vmatpush2.xpose.msra.mxu0 0.0
        %490 = vmatprep.subr.mxu0 0.0
        %491 = vmatpush2.xpose.msra.mxu0 0.0
        %492 = vmatprep.subr.mxu0 0.0
        %493 = vmatpush2.xpose.msra.mxu0 0.0
        %494 = vmatprep.subr.mxu0 0.0
        %495 = vmatpush2.xpose.msra.mxu0 0.0
        %496 = vmatprep.subr.mxu0 0.0
        %497 = vmatpush2.xpose.msra.mxu0 0.0
        %498 = vmatprep.subr.mxu0 0.0
        %499 = vmatpush2.xpose.msra.mxu0 0.0
        %500 = vmatprep.subr.mxu0 0.0
        %501 = vmatpush2.xpose.msra.mxu0 0.0
        %502 = vmatprep.subr.mxu0 0.0
        %503 = vmatpush2.xpose.msra.mxu0 0.0
        %504 = vmatprep.subr.mxu0 0.0
        %505 = vmatpush2.xpose.msra.mxu0 0.0
        %506 = vmatprep.subr.mxu0 0.0
        %507 = vmatpush2.xpose.msra.mxu0 0.0
        %508 = vmatprep.subr.mxu0 0.0
        %509 = vmatpush2.xpose.msra.mxu0 0.0
        %510 = vmatprep.subr.mxu0 0.0
        %511 = vmatpush2.xpose.msra.mxu0 0.0
        %512 = vmatprep.subr.mxu0 0.0
        %513 = vmatpush2.xpose.msra.mxu0 0.0
        %514 = vmatprep.mubr.f32.mxu0 0.0
        %515 = vmatmul.mubr.f32.gmra.mxu0 %v355
        %v516 = vpop.f32.mrf.mxu0
        %v517 = vadd.f32 %v276, %v516
        %v518 = vpop.f32.mrf.mxu0
        %519 = vmatprep.mubr.f32.mxu0 0.0
        %520 = vmatmul.mubr.f32.gmra.mxu0 %v358
        %v521 = vpop.f32.mrf.mxu0
        %v522 = vadd.f32 %v281, %v521
        %v523 = vpop.f32.mrf.mxu0
        %524 = vmatprep.mubr.f32.mxu0 0.0
        %525 = vmatmul.mubr.f32.gmra.mxu0 %v361
        %v526 = vpop.f32.mrf.mxu0
        %v527 = vadd.f32 %v286, %v526
        %v528 = vpop.f32.mrf.mxu0
        %529 = vmatprep.mubr.f32.mxu0 0.0
        %530 = vmatmul.mubr.f32.gmra.mxu0 %v364
        %v531 = vpop.f32.mrf.mxu0
        %v532 = vadd.f32 %v291, %v531
        %v533 = vpop.f32.mrf.mxu0
        %534 = vmatprep.mubr.f32.mxu0 0.0
        %535 = vmatmul.mubr.f32.gmra.mxu0 %v367
        %v536 = vpop.f32.mrf.mxu0
        %v537 = vadd.f32 %v296, %v536
        %v538 = vpop.f32.mrf.mxu0
        %539 = vmatprep.mubr.f32.mxu0 0.0
        %540 = vmatmul.mubr.f32.gmra.mxu0 %v370
        %v541 = vpop.f32.mrf.mxu0
        %v542 = vadd.f32 %v301, %v541
        %v543 = vpop.f32.mrf.mxu0
        %544 = vmatprep.mubr.f32.mxu0 0.0
        %545 = vmatmul.mubr.f32.gmra.mxu0 %v373
        %v546 = vpop.f32.mrf.mxu0
        %v547 = vadd.f32 %v306, %v546
        %v548 = vpop.f32.mrf.mxu0
        %549 = vmatprep.mubr.f32.mxu0 0.0
        %550 = vmatmul.mubr.f32.gmra.mxu0 %v376
        %v551 = vpop.f32.mrf.mxu0
        %v552 = vadd.f32 %v311, %v551
        %v553 = vpop.f32.mrf.mxu0
        %554 = vmatprep.mubr.f32.mxu0 0.0
        %555 = vmatmul.mubr.f32.gmra.mxu0 %v379
        %v556 = vpop.f32.mrf.mxu0
        %v557 = vadd.f32 %v316, %v556
        %v558 = vpop.f32.mrf.mxu0
        %559 = vmatprep.mubr.f32.mxu0 0.0
        %560 = vmatmul.mubr.f32.gmra.mxu0 %v382
        %v561 = vpop.f32.mrf.mxu0
        %v562 = vadd.f32 %v321, %v561
        %v563 = vpop.f32.mrf.mxu0
        %564 = vmatprep.mubr.f32.mxu0 0.0
        %565 = vmatmul.mubr.f32.gmra.mxu0 %v385
        %v566 = vpop.f32.mrf.mxu0
        %v567 = vadd.f32 %v326, %v566
        %v568 = vpop.f32.mrf.mxu0
        %569 = vmatprep.mubr.f32.mxu0 0.0
        %570 = vmatmul.mubr.f32.gmra.mxu0 %v388
        %v571 = vpop.f32.mrf.mxu0
        %v572 = vadd.f32 %v331, %v571
        %v573 = vpop.f32.mrf.mxu0
        %574 = vmatprep.mubr.f32.mxu0 0.0
        %575 = vmatmul.mubr.f32.gmra.mxu0 %v391
        %v576 = vpop.f32.mrf.mxu0
        %v577 = vadd.f32 %v336, %v576
        %v578 = vpop.f32.mrf.mxu0
        %579 = vmatprep.mubr.f32.mxu0 0.0
        %580 = vmatmul.mubr.f32.gmra.mxu0 %v394
        %v581 = vpop.f32.mrf.mxu0
        %v582 = vadd.f32 %v341, %v581
        %v583 = vpop.f32.mrf.mxu0
        %584 = vmatprep.mubr.f32.mxu0 0.0
        %585 = vmatmul.mubr.f32.gmra.mxu0 %v397
        %v586 = vpop.f32.mrf.mxu0
        %v587 = vadd.f32 %v346, %v586
        %v588 = vpop.f32.mrf.mxu0
        %589 = vmatprep.mubr.f32.mxu0 0.0
        %590 = vmatmul.mubr.f32.gmra.mxu0 %v400
        %v591 = vpop.f32.mrf.mxu0
        %v592 = vadd.f32 %v351, %v591
        %v593 = vpop.f32.mrf.mxu0
        %594 = vdwg.mxu0
        %v595 = vmax.f32 %v517, 0.0
        %v596 = vmax.f32 %v522, 0.0
        %v597 = vmax.f32 %v527, 0.0
        %v598 = vmax.f32 %v532, 0.0
        %v599 = vmax.f32 %v537, 0.0
        %v600 = vmax.f32 %v542, 0.0
        %v601 = vmax.f32 %v547, 0.0
        %v602 = vmax.f32 %v552, 0.0
        %v603 = vmax.f32 %v557, 0.0
        %v604 = vmax.f32 %v562, 0.0
        %v605 = vmax.f32 %v567, 0.0
        %v606 = vmax.f32 %v572, 0.0
        %v607 = vmax.f32 %v577, 0.0
        %v608 = vmax.f32 %v582, 0.0
        %v609 = vmax.f32 %v587, 0.0
        %v610 = vmax.f32 %v592, 0.0
        %v611 = vld [vmem:[%s3] sm:$0xff]
        %v612 = vld [vmem:[%s3 + $0x8] sm:$0xff]
        %v613 = vld [vmem:[%s3 + $0x10] sm:$0xff]
        %v614 = vld [vmem:[%s3 + $0x18] sm:$0xff]
        %v615 = vld [vmem:[%s3 + $0x20] sm:$0xff]
        %v616 = vld [vmem:[%s3 + $0x28] sm:$0xff]
        %v617 = vld [vmem:[%s3 + $0x30] sm:$0xff]
        %v618 = vld [vmem:[%s3 + $0x38] sm:$0xff]
        %v619 = vld [vmem:[%s3 + $0x40] sm:$0xff]
        %v620 = vld [vmem:[%s3 + $0x48] sm:$0xff]
        %v621 = vld [vmem:[%s3 + $0x50] sm:$0xff]
        %v622 = vld [vmem:[%s3 + $0x58] sm:$0xff]
        %v623 = vld [vmem:[%s3 + $0x60] sm:$0xff]
        %v624 = vld [vmem:[%s3 + $0x68] sm:$0xff]
        %v625 = vld [vmem:[%s3 + $0x70] sm:$0xff]
        %v626 = vld [vmem:[%s3 + $0x78] sm:$0xff]
        %628 = vset.pattern.permute.xlu0 0
        %629 = vperm.xlu0 %628, %v611
        %v630 = vpop.permute.xlu0 %629
        %633 = vset.pattern.permute.xlu0 0
        %634 = vperm.xlu0 %633, %v612
        %v635 = vpop.permute.xlu0 %634
        %638 = vset.pattern.permute.xlu0 0
        %639 = vperm.xlu0 %638, %v613
        %v640 = vpop.permute.xlu0 %639
        %643 = vset.pattern.permute.xlu0 0
        %644 = vperm.xlu0 %643, %v614
        %v645 = vpop.permute.xlu0 %644
        %648 = vset.pattern.permute.xlu0 0
        %649 = vperm.xlu0 %648, %v615
        %v650 = vpop.permute.xlu0 %649
        %653 = vset.pattern.permute.xlu0 0
        %654 = vperm.xlu0 %653, %v616
        %v655 = vpop.permute.xlu0 %654
        %658 = vset.pattern.permute.xlu0 0
        %659 = vperm.xlu0 %658, %v617
        %v660 = vpop.permute.xlu0 %659
        %663 = vset.pattern.permute.xlu0 0
        %664 = vperm.xlu0 %663, %v618
        %v665 = vpop.permute.xlu0 %664
        %668 = vset.pattern.permute.xlu0 0
        %669 = vperm.xlu0 %668, %v619
        %v670 = vpop.permute.xlu0 %669
        %673 = vset.pattern.permute.xlu0 0
        %674 = vperm.xlu0 %673, %v620
        %v675 = vpop.permute.xlu0 %674
        %678 = vset.pattern.permute.xlu0 0
        %679 = vperm.xlu0 %678, %v621
        %v680 = vpop.permute.xlu0 %679
        %683 = vset.pattern.permute.xlu0 0
        %684 = vperm.xlu0 %683, %v622
        %v685 = vpop.permute.xlu0 %684
        %688 = vset.pattern.permute.xlu0 0
        %689 = vperm.xlu0 %688, %v623
        %v690 = vpop.permute.xlu0 %689
        %693 = vset.pattern.permute.xlu0 0
        %694 = vperm.xlu0 %693, %v624
        %v695 = vpop.permute.xlu0 %694
        %698 = vset.pattern.permute.xlu0 0
        %699 = vperm.xlu0 %698, %v625
        %v700 = vpop.permute.xlu0 %699
        %703 = vset.pattern.permute.xlu0 0
        %704 = vperm.xlu0 %703, %v626
        %v705 = vpop.permute.xlu0 %704
        %v707 = vmul.f32 %v595, %v630
        %v708 = vmul.f32 %v596, %v635
        %v709 = vmul.f32 %v597, %v640
        %v710 = vmul.f32 %v598, %v645
        %v711 = vmul.f32 %v599, %v650
        %v712 = vmul.f32 %v600, %v655
        %v713 = vmul.f32 %v601, %v660
        %v714 = vmul.f32 %v602, %v665
        %v715 = vmul.f32 %v603, %v670
        %v716 = vmul.f32 %v604, %v675
        %v717 = vmul.f32 %v605, %v680
        %v718 = vmul.f32 %v606, %v685
        %v719 = vmul.f32 %v607, %v690
        %v720 = vmul.f32 %v608, %v695
        %v721 = vmul.f32 %v609, %v700
        %v722 = vmul.f32 %v610, %v705
        %v723 = vadd.f32 %v707, %v708
        %v724 = vadd.f32 %v723, %v709
        %v725 = vadd.f32 %v724, %v710
        %v726 = vadd.f32 %v725, %v711
        %v727 = vadd.f32 %v726, %v712
        %v728 = vadd.f32 %v727, %v713
        %v729 = vadd.f32 %v728, %v714
        %v730 = vadd.f32 %v729, %v715
        %v731 = vadd.f32 %v730, %v716
        %v732 = vadd.f32 %v731, %v717
        %v733 = vadd.f32 %v732, %v718
        %v734 = vadd.f32 %v733, %v719
        %v735 = vadd.f32 %v734, %v720
        %v736 = vadd.f32 %v735, %v721
        %v737 = vadd.f32 %v736, %v722
        %v738 = vrot.slane %v737, 4
        %v739 = vadd.f32 %v737, %v738
        %v740 = vrot.slane %v739, 2
        %v741 = vadd.f32 %v739, %v740
        %v742 = vrot.slane %v741, 1
        %v743 = vadd.f32 %v741, %v742
        %s744 = sld [smem:[#allocation2]]
        %v745 = vstv %s744
        %v746 = vadd.f32 %v743, %v745
        %v747 = vxor.u32 %v746, 2147483648
        %v748 = vmul.f32 %v747, 1.442695
        %v749 = vpow.pop %v748
        %v750 = vadd.f32 %v749, 1.0
        %v751 = vrcp.pop %v750
        %v752 = vmul.f32 1.0, %v751
        %753 = vst [vmem:[%s218] sm:$0x1] %v752
        %s754 = sand.u32 %s138, 1
        %s755 = scalar_lea.sflag [#allocation4], %s754
        %s756 = sand.u32 %s138, 1
        %s757 = scalar_lea.vmem [#allocation3], %s756
        // Predicated region
        $region41: #{tpu_custom_call.1} parent=39 // pred_check
          %p758 = pneg %p148
        $region42: #{tpu_custom_call.1} parent=39 // pred_check_branch
          %760 = sbr.rel (%p758) target = $region44
        $region43: #{tpu_custom_call.1} parent=39 // pred_region
          %s762 = ssub.s32 16, 16
          %763 = vsyncadd %s755, %s762
          %s764 = smul.addr %s20, 16
          %s765 = scalar_lea.hbm %s5, %s764
          %s767 = sshll.u32 %s757, 4
          %s768 = int_to_ptr.vmem [resolvable:$true] %s767
          %770 = dma.vmem_to_hbm [thread:$0]  %s768, 16, %s765, %s755
        $region44: #{tpu_custom_call.1} parent=39 // pred_fallthru
          _
      $region40: #{tpu_custom_call.1} parent=5 // pred_fallthru
        _
      %p771 = scmp.le.s32.totalorder 2, %s15
      // Predicated region
      $region45: #{tpu_custom_call.1} parent=5 // pred_check
        %p772 = pneg %p771
      $region46: #{tpu_custom_call.1} parent=5 // pred_check_branch
        %774 = sbr.rel (%p772) target = $region48
      $region47: #{tpu_custom_call.1} parent=5 // pred_region
        %s775 = ssub.s32 %s15, 2
        // Predicated region
        $region49: #{tpu_custom_call.1} parent=47 // pred_check
          %p776 = pneg %p154
        $region50: #{tpu_custom_call.1} parent=47 // pred_check_branch
          %778 = sbr.rel (%p776) target = $region52
        $region51: #{tpu_custom_call.1} parent=47 // pred_region
          %s779 = sand.u32 %s139, 1
          %s780 = scalar_lea.sflag [#allocation4], %s779
          %s781 = sand.u32 %s139, 1
          %s782 = scalar_lea.vmem [#allocation3], %s781
          %783 = dma.done %s780, 16
        $region52: #{tpu_custom_call.1} parent=47 // pred_fallthru
          _
      $region48: #{tpu_custom_call.1} parent=5 // pred_fallthru
        _
    $region6: #{tpu_custom_call.1} parent=1 // loop_footer
      %s19 = sadd.s32 1, %s15
    $region7: #{tpu_custom_call.1} parent=1 // loop_footer_branch
      %14 = sbr.rel target = $region3
    $region8: #{tpu_custom_call.1} parent=1 // loop_exit
      _
    %784 = vsyncpa [#allocation4], 1
    %s785 = scalar_lea.sflag [#allocation4], 1
    %786 = vsyncpa %s785, 1

</llo_original>
